<compile_context>
chip_gen: v5e
topology: v5e:2x2
jax: 0.10.0
libtpu: 0.0.40
codegen_flags: <defaults>
</compile_context>

<pallas_src>
import jax
import jax.numpy as jnp
from jax import lax
from jax.experimental import pallas as pl
from jax.experimental.pallas import tpu as pltpu


def _round_up(x, mult):
    return ((x + mult - 1) // mult) * mult


def _vmem_bytes(tn, tc, d, w_bytes):
    """Rough double-buffered VMEM footprint for a (tn, tc) tile choice."""
    return (2 * tn * d * 4          # x block, f32, double-buffered
            + 2 * d * tc * w_bytes  # W^T class tile, double-buffered
            + tn * d * w_bytes      # normalized-x scratch (MXU LHS)
            + 6 * tn * 128 * 4)     # labels/out blocks + 2 widened accumulators


def _lane_fold(arr, nsub):
    """Sum nsub lane-blocks of width 128 into one (tn, 128) block.

    Static, vreg-aligned 128-wide lane slices -> pure VPU adds (no XLU
    cross-lane reduce, no relayout)."""
    acc = arr[:, 0:128]
    for k in range(1, nsub):
        acc = acc + arr[:, k * 128:(k + 1) * 128]
    return acc


def _make_am_softmax_kernel(s, m, c_actual, c_tile):
    """s, m: loss hyperparams; c_actual: real class count; c_tile: class tile
    width (multiple of 128)."""

    def kernel(x_ref, labels_ref, wt_ref, out_ref,
               xn_ref, tgt_ref, sumexp_ref):
        c = pl.program_id(1)
        nc = pl.num_programs(1)

        # Row-tile prologue: normalize x once (f32 math, hoisted out of the
        # class loop, then cast to the MXU compute dtype) and zero the
        # widened per-row accumulators.
        @pl.when(c == 0)
        def _():
            x = x_ref[...]                                    # (TN, D) f32
            sum_sq = jnp.sum(x * x, axis=1, keepdims=True)    # (TN, 1)
            inv_norm = lax.rsqrt(jnp.maximum(sum_sq, 1e-24))  # EUP rsqrt
            xn_ref[...] = (x * inv_norm).astype(xn_ref.dtype)
            tgt_ref[...] = jnp.zeros_like(tgt_ref)
            sumexp_ref[...] = jnp.zeros_like(sumexp_ref)

        # (TN, D) @ (D, TC) on the MXU, lane-dense RHS, f32 accumulation.
        wf = jnp.dot(xn_ref[...], wt_ref[...],
                     preferred_element_type=jnp.float32)      # (TN, TC) f32
        tn, tc = wf.shape
        nsub = tc // 128

        labels = labels_ref[...]                              # (TN, 1) int32
        # Grid-invariant tile-local iota; shift the *scalars* instead of
        # rebuilding a global iota + full-tile add every grid step.
        local_ids = lax.broadcasted_iota(jnp.int32, wf.shape, 1)
        is_target = local_ids == (labels - c * c_tile)        # (TN, TC)
        keep = jnp.logical_and(jnp.logical_not(is_target),
                               local_ids < (c_actual - c * c_tile))

        # Widened (TN, 128) accumulators: per-tile fold is plain vreg adds.
        tgt_ref[...] += _lane_fold(jnp.where(is_target, wf, 0.0), nsub)
        sumexp_ref[...] += _lane_fold(
            jnp.where(keep, jnp.exp(s * wf), 0.0), nsub)

        # Epilogue on the last class tile: single cross-lane reduce + loss.
        @pl.when(c == nc - 1)
        def _():
            target = jnp.sum(tgt_ref[...], axis=1, keepdims=True)   # (TN, 1)
            excl = jnp.sum(sumexp_ref[...], axis=1, keepdims=True)  # (TN, 1)
            numerator = s * (target - m)
            denominator = jnp.exp(numerator) + excl
            out_ref[...] = numerator - jnp.log(denominator)

    return kernel


def am_softmax_loss(x, weight, labels, s=30.0, m=0.4,
                    compute_dtype=jnp.bfloat16,
                    max_row_tile=512, max_class_tile=2048,
                    vmem_budget_bytes=40 * 1024 * 1024):
    """x: (N, in_features); weight: (out_features, in_features); labels: (N,).
    compute_dtype: dtype of the MXU operands (W^T and normalized x); the
    accumulation, exp/log and loss epilogue stay f32.  Returns scalar f32."""
    N, D = x.shape
    C, D2 = weight.shape
    assert D == D2
    assert labels.shape == (N,)

    max_row_tile = max(int(max_row_tile), 8)
    max_class_tile = max(int(max_class_tile), 128)
    w_bytes = jnp.dtype(compute_dtype).itemsize

    # ---- Tile selection ---------------------------------------------------
    # Prefer a single row tile covering the whole (padded) batch: W^T then
    # streams from HBM exactly once (the dominant traffic term when C >> N).
    # Otherwise take the largest row tile (then class tile) that fits the
    # explicit VMEM budget (v7x: 64 MiB physical / 32 MiB scoped default).
    n_pad8 = _round_up(N, 8)
    c_pad128 = _round_up(C, 128)

    tn_cands, seen = [], set()
    for t in (n_pad8, max_row_tile, 512, 256, 128, 64, 32, 16, 8):
        if 0 < t <= n_pad8 and t % 8 == 0 and t not in seen:
            seen.add(t)
            tn_cands.append(t)
    tc_cands, seen = [], set()
    for t in (max_class_tile, 2048, 1024, 512, 256, 128):
        t = min(t, c_pad128)
        if t <= max_class_tile and t % 128 == 0 and t not in seen:
            seen.add(t)
            tc_cands.append(t)
    tc_cands.sort(reverse=True)

    tn, tc = tn_cands[-1], tc_cands[-1]          # minimal fallback
    chosen = False
    for cand_tn in tn_cands:                      # larger row tile first
        for cand_tc in tc_cands:                  # then larger class tile
            if _vmem_bytes(cand_tn, cand_tc, D, w_bytes) <= vmem_budget_bytes:
                tn, tc = cand_tn, cand_tc
                chosen = True
                break
        if chosen:
            break

    n_pad = _round_up(N, tn)
    c_pad = _round_up(C, tc)

    # ---- Operand prep (skip copies when already aligned) -------------------
    x = x.astype(jnp.float32)
    labels = labels.astype(jnp.int32)
    if n_pad == N:
        x_p = x
        labels_p = labels.reshape(N, 1)
    else:
        x_p = jnp.zeros((n_pad, D), jnp.float32).at[:N].set(x)
        labels_p = jnp.zeros((n_pad, 1), jnp.int32).at[:N, 0].set(labels)

    # Pre-transpose W -> (D, C) so each class tile is a lane-dense MXU RHS.
    # TODO(synk): cache this transposed/padded compute_dtype copy across
    # training steps instead of rebuilding it every call.
    wt = weight.astype(compute_dtype).T                        # (D, C)
    if c_pad == C:
        wt_p = wt
    else:
        wt_p = jnp.zeros((D, c_pad), compute_dtype).at[:, :C].set(wt)

    grid = (n_pad // tn, c_pad // tc)
    kernel = _make_am_softmax_kernel(float(s), float(m), C, tc)

    est = _vmem_bytes(tn, tc, D, w_bytes)
    vmem_limit = int(min(64 * 1024 * 1024,
                         max(est + (4 << 20), 32 * 1024 * 1024)))

    per_row = pl.pallas_call(
        kernel,
        out_shape=jax.ShapeDtypeStruct((n_pad, 1), jnp.float32),
        grid=grid,
        in_specs=[
            pl.BlockSpec((tn, D), lambda n, c: (n, 0)),   # x (resident over C)
            pl.BlockSpec((tn, 1), lambda n, c: (n, 0)),   # labels
            pl.BlockSpec((D, tc), lambda n, c: (0, c)),   # W^T class tile
        ],
        out_specs=pl.BlockSpec((tn, 1), lambda n, c: (n, 0)),
        scratch_shapes=[
            pltpu.VMEM((tn, D), compute_dtype),   # normalized x (MXU LHS)
            pltpu.VMEM((tn, 128), jnp.float32),   # widened target-logit acc
            pltpu.VMEM((tn, 128), jnp.float32),   # widened excl. exp-sum acc
        ],
        compiler_params=pltpu.CompilerParams(
            dimension_semantics=("parallel", "arbitrary"),
            vmem_limit_bytes=vmem_limit),
    )(x_p, labels_p, wt_p)

    # -mean over the real rows only (padded rows excluded).
    return -jnp.sum(per_row[:N, 0]) / N


def _reference(x, weight, labels, s, m):
    """Plain-JAX reference (same unstabilized math as the PyTorch module)."""
    N = x.shape[0]
    C = weight.shape[0]
    xn = x / jnp.maximum(
        jnp.sqrt(jnp.sum(x * x, axis=1, keepdims=True)), 1e-12)
    wf = xn @ weight.T
    tgt = wf[jnp.arange(N), labels]
    num = s * (tgt - m)
    oh = jax.nn.one_hot(labels, C, dtype=jnp.float32)
    den = jnp.exp(num) + jnp.sum(jnp.exp(s * wf) * (1.0 - oh), axis=1)
    return -jnp.mean(num - jnp.log(den))


if __name__ == "__main__":
    s_param, m_param = 30.0, 0.4
    key = jax.random.PRNGKey(0)

    # Test 1: module-sized small shapes, f32 compute dtype (tight semantics).
    N, in_features, out_features = 8, 32, 16
    k1, k2, k3, key = jax.random.split(key, 4)
    x = jax.random.normal(k1, (N, in_features), dtype=jnp.float32)
    bound = 1.0 / (in_features ** 0.5)
    weight = jax.random.uniform(k2, (out_features, in_features),
                                dtype=jnp.float32, minval=-bound, maxval=bound)
    labels = jax.random.randint(k3, (N,), 0, out_features, dtype=jnp.int32)

    loss = am_softmax_loss(x, weight, labels, s=s_param, m=m_param,
                           compute_dtype=jnp.float32)
    loss = jax.block_until_ready(loss)
    ref = _reference(x, weight, labels, s_param, m_param)
    assert jnp.allclose(loss, ref, rtol=2e-2, atol=2e-2), (loss, ref)

    # Test 2: default bf16 MXU operands; exercises row padding, class-column
    # padding and a multi-tile class axis (looser tol: bf16 logits * s=30).
    N2, D2f, C2 = 20, 32, 300
    k1, k2, k3, key = jax.random.split(key, 4)
    x2 = jax.random.normal(k1, (N2, D2f), dtype=jnp.float32)
    bound2 = 1.0 / (D2f ** 0.5)
    w2 = jax.random.uniform(k2, (C2, D2f), dtype=jnp.float32,
                            minval=-bound2, maxval=bound2)
    l2 = jax.random.randint(k3, (N2,), 0, C2, dtype=jnp.int32)

    loss2 = am_softmax_loss(x2, w2, l2, s=s_param, m=m_param,
                            max_class_tile=128)
    loss2 = jax.block_until_ready(loss2)
    ref2 = _reference(x2, w2, l2, s_param, m_param)
    assert jnp.allclose(loss2, ref2, rtol=3e-2, atol=3e-1), (loss2, ref2)

    print("KERNEL_OK")
</pallas_src>

<mosaic_0001>
module attributes {stable_mosaic.version = 11 : i64} {
  func.func @kernel(%arg0: i32, %arg1: i32, %arg2: memref<8x32xf32, #tpu.memory_space<vmem>>, %arg3: memref<8x1xi32, #tpu.memory_space<vmem>>, %arg4: memref<32x128xf32, #tpu.memory_space<vmem>>, %arg5: memref<8x1xf32, #tpu.memory_space<vmem>>, %arg6: memref<8x32xf32, #tpu.memory_space<vmem>>, %arg7: memref<8x128xf32, #tpu.memory_space<vmem>>, %arg8: memref<8x128xf32, #tpu.memory_space<vmem>>) attributes {dimension_semantics = [#tpu.dimension_semantics<parallel>, #tpu.dimension_semantics<arbitrary>], iteration_bounds = array<i64: 1, 1>, scalar_prefetch = 0 : i64, scratch_operands = 3 : i64, tpu.core_type = #tpu.core_type<tc>, window_params = [{transform_indices = @transform_0, window_bounds = array<i64: 8, 32>}, {transform_indices = @transform_1, window_bounds = array<i64: 8, 1>}, {transform_indices = @transform_2, window_bounds = array<i64: 32, 128>}, {transform_indices = @transform_3, window_bounds = array<i64: 8, 1>}]} {
    %c0_i32 = arith.constant 0 : i32
    %0 = arith.cmpi eq, %arg1, %c0_i32 : i32
    %1 = arith.extui %0 : i1 to i32
    %c0_i32_0 = arith.constant 0 : i32
    %2 = arith.cmpi ne, %1, %c0_i32_0 : i32
    scf.if %2 {
      %c0_21 = arith.constant 0 : index
      %c0_22 = arith.constant 0 : index
      %35 = vector.load %arg2[%c0_21, %c0_22] : memref<8x32xf32, #tpu.memory_space<vmem>>, vector<8x32xf32>
      %36 = arith.mulf %35, %35 : vector<8x32xf32>
      %cst_23 = arith.constant dense<0.000000e+00> : vector<8xf32>
      %37 = vector.multi_reduction <add>, %36, %cst_23 [1] : vector<8x32xf32> to vector<8xf32>
      %38 = vector.shape_cast %37 : vector<8xf32> to vector<8x1xf32>
      %cst_24 = arith.constant 1.000000e-24 : f32
      %39 = vector.broadcast %cst_24 : f32 to vector<8x1xf32>
      %40 = arith.maximumf %38, %39 : vector<8x1xf32>
      %41 = math.rsqrt %40 : vector<8x1xf32>
      %42 = vector.broadcast %41 : vector<8x1xf32> to vector<8x32xf32>
      %43 = arith.mulf %35, %42 : vector<8x32xf32>
      %c0_25 = arith.constant 0 : index
      %c0_26 = arith.constant 0 : index
      %44 = vector.load %arg6[%c0_25, %c0_26] : memref<8x32xf32, #tpu.memory_space<vmem>>, vector<8x32xf32>
      tpu.vector_store %arg6[%c0_25, %c0_26], %43 {strides = array<i32>} : memref<8x32xf32, #tpu.memory_space<vmem>>, vector<8x32xf32>,
      %cst_27 = arith.constant 0.000000e+00 : f32
      %45 = vector.broadcast %cst_27 : f32 to vector<8x128xf32>
      %c0_28 = arith.constant 0 : index
      %c0_29 = arith.constant 0 : index
      %46 = vector.load %arg7[%c0_28, %c0_29] : memref<8x128xf32, #tpu.memory_space<vmem>>, vector<8x128xf32>
      tpu.vector_store %arg7[%c0_28, %c0_29], %45 {strides = array<i32>} : memref<8x128xf32, #tpu.memory_space<vmem>>, vector<8x128xf32>,
      %cst_30 = arith.constant 0.000000e+00 : f32
      %47 = vector.broadcast %cst_30 : f32 to vector<8x128xf32>
      %c0_31 = arith.constant 0 : index
      %c0_32 = arith.constant 0 : index
      %48 = vector.load %arg8[%c0_31, %c0_32] : memref<8x128xf32, #tpu.memory_space<vmem>>, vector<8x128xf32>
      tpu.vector_store %arg8[%c0_31, %c0_32], %47 {strides = array<i32>} : memref<8x128xf32, #tpu.memory_space<vmem>>, vector<8x128xf32>,
    } else {
    }
    %c0 = arith.constant 0 : index
    %c0_1 = arith.constant 0 : index
    %3 = vector.load %arg6[%c0, %c0_1] : memref<8x32xf32, #tpu.memory_space<vmem>>, vector<8x32xf32>
    %c0_2 = arith.constant 0 : index
    %c0_3 = arith.constant 0 : index
    %4 = vector.load %arg4[%c0_2, %c0_3] : memref<32x128xf32, #tpu.memory_space<vmem>>, vector<32x128xf32>
    %cst = arith.constant dense<0.000000e+00> : vector<8x128xf32>
    %5 = tpu.matmul %3, %4, %cst {dimension_numbers = #tpu.dot_dimension_numbers<[1], [0], [0], [1], [0, 0, 1, 1], [], []>} : vector<8x32xf32>, vector<32x128xf32>, vector<8x128xf32> -> vector<8x128xf32>
    %c0_4 = arith.constant 0 : index
    %c0_5 = arith.constant 0 : index
    %6 = vector.load %arg3[%c0_4, %c0_5] : memref<8x1xi32, #tpu.memory_space<vmem>>, vector<8x1xi32>
    %7 = tpu.iota {dimensions = array<i32: 1>} : vector<8x128xi32>
    %c128_i32 = arith.constant 128 : i32
    %8 = arith.muli %arg1, %c128_i32 : i32
    %9 = vector.broadcast %8 : i32 to vector<8x1xi32>
    %10 = arith.subi %6, %9 : vector<8x1xi32>
    %11 = vector.broadcast %10 : vector<8x1xi32> to vector<8x128xi32>
    %12 = arith.cmpi eq, %7, %11 : vector<8x128xi32>
    %cst_6 = arith.constant dense<true> : vector<8x128xi1>
    %13 = arith.xori %12, %cst_6 : vector<8x128xi1>
    %c128_i32_7 = arith.constant 128 : i32
    %14 = arith.muli %arg1, %c128_i32_7 : i32
    %c16_i32 = arith.constant 16 : i32
    %15 = arith.subi %c16_i32, %14 : i32
    %16 = vector.broadcast %15 : i32 to vector<8x128xi32>
    %17 = arith.cmpi slt, %7, %16 : vector<8x128xi32>
    %18 = arith.andi %13, %17 : vector<8x128xi1>
    %c0_8 = arith.constant 0 : index
    %c0_9 = arith.constant 0 : index
    %19 = vector.load %arg7[%c0_8, %c0_9] : memref<8x128xf32, #tpu.memory_space<vmem>>, vector<8x128xf32>
    %cst_10 = arith.constant 0.000000e+00 : f32
    %20 = vector.broadcast %cst_10 : f32 to vector<8x128xf32>
    %21 = arith.select %12, %5, %20 : vector<8x128xi1>, vector<8x128xf32>
    %22 = arith.addf %19, %21 : vector<8x128xf32>
    %c0_11 = arith.constant 0 : index
    %c0_12 = arith.constant 0 : index
    %23 = vector.load %arg7[%c0_11, %c0_12] : memref<8x128xf32, #tpu.memory_space<vmem>>, vector<8x128xf32>
    tpu.vector_store %arg7[%c0_11, %c0_12], %22 {strides = array<i32>} : memref<8x128xf32, #tpu.memory_space<vmem>>, vector<8x128xf32>,
    %c0_13 = arith.constant 0 : index
    %c0_14 = arith.constant 0 : index
    %24 = vector.load %arg8[%c0_13, %c0_14] : memref<8x128xf32, #tpu.memory_space<vmem>>, vector<8x128xf32>
    %cst_15 = arith.constant 3.000000e+01 : f32
    %25 = vector.broadcast %cst_15 : f32 to vector<8x128xf32>
    %26 = arith.mulf %25, %5 : vector<8x128xf32>
    %27 = math.exp %26 : vector<8x128xf32>
    %cst_16 = arith.constant 0.000000e+00 : f32
    %28 = vector.broadcast %cst_16 : f32 to vector<8x128xf32>
    %29 = arith.select %18, %27, %28 : vector<8x128xi1>, vector<8x128xf32>
    %30 = arith.addf %24, %29 : vector<8x128xf32>
    %c0_17 = arith.constant 0 : index
    %c0_18 = arith.constant 0 : index
    %31 = vector.load %arg8[%c0_17, %c0_18] : memref<8x128xf32, #tpu.memory_space<vmem>>, vector<8x128xf32>
    tpu.vector_store %arg8[%c0_17, %c0_18], %30 {strides = array<i32>} : memref<8x128xf32, #tpu.memory_space<vmem>>, vector<8x128xf32>,
    %c0_i32_19 = arith.constant 0 : i32
    %32 = arith.cmpi eq, %arg1, %c0_i32_19 : i32
    %33 = arith.extui %32 : i1 to i32
    %c0_i32_20 = arith.constant 0 : i32
    %34 = arith.cmpi ne, %33, %c0_i32_20 : i32
    scf.if %34 {
      %c0_21 = arith.constant 0 : index
      %c0_22 = arith.constant 0 : index
      %35 = vector.load %arg7[%c0_21, %c0_22] : memref<8x128xf32, #tpu.memory_space<vmem>>, vector<8x128xf32>
      %cst_23 = arith.constant dense<0.000000e+00> : vector<8xf32>
      %36 = vector.multi_reduction <add>, %35, %cst_23 [1] : vector<8x128xf32> to vector<8xf32>
      %37 = vector.shape_cast %36 : vector<8xf32> to vector<8x1xf32>
      %c0_24 = arith.constant 0 : index
      %c0_25 = arith.constant 0 : index
      %38 = vector.load %arg8[%c0_24, %c0_25] : memref<8x128xf32, #tpu.memory_space<vmem>>, vector<8x128xf32>
      %cst_26 = arith.constant dense<0.000000e+00> : vector<8xf32>
      %39 = vector.multi_reduction <add>, %38, %cst_26 [1] : vector<8x128xf32> to vector<8xf32>
      %40 = vector.shape_cast %39 : vector<8xf32> to vector<8x1xf32>
      %cst_27 = arith.constant 4.000000e-01 : f32
      %41 = vector.broadcast %cst_27 : f32 to vector<8x1xf32>
      %42 = arith.subf %37, %41 : vector<8x1xf32>
      %cst_28 = arith.constant 3.000000e+01 : f32
      %43 = vector.broadcast %cst_28 : f32 to vector<8x1xf32>
      %44 = arith.mulf %43, %42 : vector<8x1xf32>
      %45 = math.exp %44 : vector<8x1xf32>
      %46 = arith.addf %45, %40 : vector<8x1xf32>
      %47 = math.log %46 : vector<8x1xf32>
      %48 = arith.subf %44, %47 : vector<8x1xf32>
      %c0_29 = arith.constant 0 : index
      %c0_30 = arith.constant 0 : index
      %49 = vector.load %arg5[%c0_29, %c0_30] : memref<8x1xf32, #tpu.memory_space<vmem>>, vector<8x1xf32>
      tpu.vector_store %arg5[%c0_29, %c0_30], %48 {strides = array<i32>} : memref<8x1xf32, #tpu.memory_space<vmem>>, vector<8x1xf32>,
    } else {
    }
    return
  }
  func.func @transform_0(%arg0: i32, %arg1: i32) -> (i32, i32) {
    %c0_i32 = arith.constant 0 : i32
    %c0_i32_0 = arith.constant 0 : i32
    return %arg0, %c0_i32 : i32, i32
  }
  func.func @transform_1(%arg0: i32, %arg1: i32) -> (i32, i32) {
    %c0_i32 = arith.constant 0 : i32
    %c0_i32_0 = arith.constant 0 : i32
    return %arg0, %c0_i32 : i32, i32
  }
  func.func @transform_2(%arg0: i32, %arg1: i32) -> (i32, i32) {
    %c0_i32 = arith.constant 0 : i32
    %c0_i32_0 = arith.constant 0 : i32
    return %c0_i32, %arg1 : i32, i32
  }
  func.func @transform_3(%arg0: i32, %arg1: i32) -> (i32, i32) {
    %c0_i32 = arith.constant 0 : i32
    %c0_i32_0 = arith.constant 0 : i32
    return %arg0, %c0_i32 : i32, i32
  }
}

</mosaic_0001>

<llo_original>
// kernel: tpu_custom_call.1
$region0: #{tpu_custom_call.1}
  #allocation0 [shape = 'u32[]', space=smem, size = 0x4, offset = 0x4, fixed_abs, tag = 'smem constant byte address 0x4 - core index']
  #allocation1 [shape = 'u32[72,128]{1,0:T(1,128)}', space=vmem, size = 0x9000, scoped, tag = 'internal scratch']
  #allocation2 [shape = 'f32[8,32]{1,0:T(8,128)}', space=vmem, size = 0x1000, scoped, tag = 'scratch operand']
  #allocation3 [shape = 'f32[8,128]{1,0:T(8,128)}', space=vmem, size = 0x1000, scoped, tag = 'scratch operand']
  #allocation4 [shape = 'f32[8,128]{1,0:T(8,128)}', space=vmem, size = 0x1000, scoped, tag = 'scratch operand']
  %s0 = inlined_call_operand.vmem [shape: f32[8,32], index: 0, kind: input, shape index: {}]
  %s1 = inlined_call_operand.vmem [shape: s32[8,1], index: 1, kind: input, shape index: {}]
  %s2 = inlined_call_operand.hbm [shape: f32[32,128], index: 2, kind: input, shape index: {}]
  %s3 = inlined_call_operand.vmem [shape: f32[8,1], index: 3, kind: output, shape index: {}]
  %s4 = sld [smem:[#allocation0]]
  $region34: #{tpu_custom_call.1} parent=0
    _
  %s6 = ssub.s32 1, %s4
  %s7 = scalar_select 0, %s6, %s4
  $region1: #{tpu_custom_call.1} parent=0
    #allocation5 [shape = 'u8[16384]{0}', space=vmem, size = 0x4000, scoped, tag = 'input window, operand 2, single buffered']
    #allocation6 [shape = 's32[1]{0}', space=sflag, size = 0x4, scoped, tag = 'scoped memory for tpu_custom_call.1']
    %8 = vsyncpa [#allocation6], 0
    // Predicated region
    $region2: #{tpu_custom_call.1} parent=1 // pred_check
      _
    $region3: #{tpu_custom_call.1} parent=1 // pred_check_branch
      %10 = sbr.rel (0) target = $region5
    $region4: #{tpu_custom_call.1} parent=1 // pred_region
      _
    $region5: #{tpu_custom_call.1} parent=1 // pred_fallthru
      _
    // Predicated region
    $region6: #{tpu_custom_call.1} parent=1 // pred_check
      _
    $region7: #{tpu_custom_call.1} parent=1 // pred_check_branch
      %12 = sbr.rel (0) target = $region9
    $region8: #{tpu_custom_call.1} parent=1 // pred_region
      _
    $region9: #{tpu_custom_call.1} parent=1 // pred_fallthru
      _
    // Predicated region
    $region10: #{tpu_custom_call.1} parent=1 // pred_check
      _
    $region11: #{tpu_custom_call.1} parent=1 // pred_check_branch
      %14 = sbr.rel (0) target = $region13
    $region12: #{tpu_custom_call.1} parent=1 // pred_region
      %16 = vsyncadd [#allocation6], 0
      %s17 = sshll.u32 %s2, 4
      %s18 = int_to_ptr.hbm [resolvable:$true] %s17
      %s19 = sshll.u32 [#allocation5], 4
      %s20 = int_to_ptr.vmem [resolvable:$true] %s19
      %25 = dma.hbm_to_vmem [thread:$0]  %s18, 512, %s20, [#allocation6], 128, 128, 8
    $region13: #{tpu_custom_call.1} parent=1 // pred_fallthru
      _
    // Predicated region
    $region14: #{tpu_custom_call.1} parent=1 // pred_check
      _
    $region15: #{tpu_custom_call.1} parent=1 // pred_check_branch
      %27 = sbr.rel (0) target = $region17
    $region16: #{tpu_custom_call.1} parent=1 // pred_region
      %29 = dma.done [#allocation6], 512
    $region17: #{tpu_custom_call.1} parent=1 // pred_fallthru
      _
    %p30 = scmp.eq.s32.totalorder 0, 0
    // Predicated region
    $region18: #{tpu_custom_call.1} parent=1 // pred_check
      %p31 = pneg %p30
    $region19: #{tpu_custom_call.1} parent=1 // pred_check_branch
      %33 = sbr.rel (%p31) target = $region21
    $region20: #{tpu_custom_call.1} parent=1 // pred_region
      %v34 = vld [vmem:[%s0] sm:$0xff]
      %v35 = vmul.f32 %v34, %v34
      %vm36 = vcmask 261120
      %v37 = vsel %vm36, %v35, 0.0
      %38 = vadd.xlane.f32.xlu0 %v37
      %v39 = vpop.xlane.xlu0 %38
      %v40 = vmax.f32 %v39, 1e-24
      %v41 = vrsqrt.pop %v40
      %v42 = vmul.f32 %v41, %v40
      %v43 = vmul.f32 %v42, %v41
      %v44 = vmul.f32 0.5, %v43
      %v45 = vsub.f32 1.5, %v44
      %v46 = vmul.f32 %v41, %v45
      %vm47 = vweird.f32 %v40
      %vm48 = vweird.f32 %v41
      %vm49 = vmor %vm47, %vm48
      %v50 = vsel %vm49, %v41, %v46
      %v51 = vmul.f32 %v34, %v50
      %52 = vst.msk [vmem:[#allocation2] sm:$0xff] %vm36, %v51
      %53 = vst [vmem:[#allocation3] sm:$0xff] 0.0
      %54 = vst [vmem:[#allocation4] sm:$0xff] 0.0
    $region21: #{tpu_custom_call.1} parent=1 // pred_fallthru
      _
    %v55 = vld [vmem:[#allocation2] sm:$0xff]
    %v56 = vld [vmem:[#allocation5] sm:$0xff]
    %v57 = vld [vmem:[#allocation5 + $0x8] sm:$0xff]
    %v58 = vld [vmem:[#allocation5 + $0x10] sm:$0xff]
    %v59 = vld [vmem:[#allocation5 + $0x18] sm:$0xff]
    %vm60 = vcmask 261120
    %v62 = vsel %vm60, %v55, 0
    %64 = vmatpush.msra.mxu0 0.0
    %65 = vmatpush.msra.mxu0 0.0
    %66 = vmatpush.msra.mxu0 0.0
    %67 = vmatpush.msra.mxu0 0.0
    %68 = vmatpush.msra.mxu0 0.0
    %69 = vmatpush.msra.mxu0 0.0
    %70 = vmatpush.msra.mxu0 0.0
    %71 = vmatpush.msra.mxu0 0.0
    %72 = vmatpush.msra.mxu0 0.0
    %73 = vmatpush.msra.mxu0 0.0
    %74 = vmatpush.msra.mxu0 0.0
    %75 = vmatpush.msra.mxu0 0.0
    %76 = vmatpush.msra.mxu0 %v59
    %77 = vmatpush.msra.mxu0 %v58
    %78 = vmatpush.msra.mxu0 %v57
    %79 = vmatpush.msra.mxu0 %v56
    %80 = vmatmul.f32.gmra.mxu0 %v62
    %v81 = vpop.f32.mrf.mxu0
    %v82 = vadd.f32 0.0, %v81
    %83 = vdwg.mxu0
    %v84 = vld [vmem:[%s1] sm:$0xff]
    %v85 = vlaneseq
    %v86 = vand.u32 %v85, 127
    %s87 = smul.u32 0, 128
    %v88 = vstv %s87
    %v89 = vsub.s32 %v84, %v88
    %90 = vset.pattern.permute.xlu0 0
    %91 = vperm.xlu0 %90, %v89
    %v92 = vpop.permute.xlu0 %91
    %vm93 = vcmp.eq.s32.totalorder %v86, %v92
    %vm94 = vmxor %vm93, 1
    %s95 = ssub.s32 16, %s87
    %v96 = vstv %s95
    %vm97 = vcmp.lt.s32.totalorder %v86, %v96
    %vm98 = vmand %vm94, %vm97
    %v99 = vld [vmem:[#allocation3] sm:$0xff]
    %v100 = vsel %vm93, %v82, 0.0
    %v101 = vadd.f32 %v99, %v100
    %102 = vst [vmem:[#allocation3] sm:$0xff] %v101
    %v103 = vld [vmem:[#allocation4] sm:$0xff]
    %v104 = vmul.f32 %v82, 30.0
    %v105 = vmul.f32 %v104, 1.442695
    %v106 = vpow.pop %v105
    %v107 = vsel %vm98, %v106, 0.0
    %v108 = vadd.f32 %v103, %v107
    %109 = vst [vmem:[#allocation4] sm:$0xff] %v108
    // Predicated region
    $region22: #{tpu_custom_call.1} parent=1 // pred_check
      %p110 = pneg %p30
    $region23: #{tpu_custom_call.1} parent=1 // pred_check_branch
      %112 = sbr.rel (%p110) target = $region25
    $region24: #{tpu_custom_call.1} parent=1 // pred_region
      %v113 = vld [vmem:[#allocation3] sm:$0xff]
      %114 = vadd.xlane.f32.xlu0 %v113
      %v115 = vpop.xlane.xlu0 %114
      %v116 = vld [vmem:[#allocation4] sm:$0xff]
      %117 = vadd.xlane.f32.xlu0 %v116
      %v118 = vpop.xlane.xlu0 %117
      %v119 = vsub.f32 %v115, 0.4
      %v120 = vmul.f32 %v119, 30.0
      %v121 = vmul.f32 %v120, 1.442695
      %v122 = vpow.pop %v121
      %v123 = vadd.f32 %v122, %v118
      %v124 = vlog2.pop %v123
      %v125 = vmul.f32 %v124, 0.6931472
      %v126 = vsub.f32 %v120, %v125
      %vm127 = vcmask 7168
      %128 = vst.msk [vmem:[%s3] sm:$0xff] %vm127, %v126
    $region25: #{tpu_custom_call.1} parent=1 // pred_fallthru
      _
    // Predicated region
    $region26: #{tpu_custom_call.1} parent=1 // pred_check
      _
    $region27: #{tpu_custom_call.1} parent=1 // pred_check_branch
      %130 = sbr.rel (0) target = $region29
    $region28: #{tpu_custom_call.1} parent=1 // pred_region
      _
    $region29: #{tpu_custom_call.1} parent=1 // pred_fallthru
      _
    // Predicated region
    $region30: #{tpu_custom_call.1} parent=1 // pred_check
      _
    $region31: #{tpu_custom_call.1} parent=1 // pred_check_branch
      %132 = sbr.rel (0) target = $region33
    $region32: #{tpu_custom_call.1} parent=1 // pred_region
      _
    $region33: #{tpu_custom_call.1} parent=1 // pred_fallthru
      _
    %133 = vsyncpa [#allocation6], 1

</llo_original>
